<compile_context>
chip_gen: v7x
topology: tpu7x:2x2x1
jax: 0.10.0
libtpu: 0.0.40
codegen_flags: <defaults>
</compile_context>

<pallas_src>
import math

import jax
import jax.numpy as jnp
import numpy as np
from jax import lax
from jax.experimental import pallas as pl
from jax.experimental.pallas import tpu as pltpu


def _binary_encoder_kernel(x_ref, m_ref, b_ref, o_ref):
    """x_ref: (TILE_R, K); m_ref: (K, W); b_ref: (1, W); o_ref: (TILE_R, W)."""
    x = x_ref[...].astype(jnp.float32)
    # Rank-1 Linear(1, H), lane-folded into W = F*H output lanes via a tiny
    # selector matmul on the MXU.  MXU work is negligible next to the HBM
    # writeback, so HIGHEST precision (full-f32 passes) is free and exact.
    y = jnp.dot(x, m_ref[...], preferred_element_type=jnp.float32,
                precision=lax.Precision.HIGHEST) + b_ref[...]
    # sigmoid(y) == 0.5*tanh(0.5*y) + 0.5: one EUP transcendental + two cheap
    # VPU ops (was exp + approx-reciprocal = 2 EUP ops).
    o_ref[...] = (0.5 * jnp.tanh(0.5 * y) + 0.5).astype(o_ref.dtype)


def _choose_tile_rows(rows, K, lane_width, out_itemsize):
    """Pick the row tile so the REAL VMEM footprint stays inside budget.

    Per pipeline stage we hold (double-buffered):
      * input block  (tile_r, K) f32 -> lane dim padded to 128 in VMEM,
      * output block (tile_r, W) out_dtype,
    plus ~2 full-block f32 temporaries (matmul result / activation) that are
    not double-buffered.  Budget 36 MiB << vmem_limit_bytes (48 MiB) and well
    under v7x's 64 MiB physical VMEM.
    """
    budget = 36 * 1024 * 1024
    in_row = pl.cdiv(K, 128) * 128 * 4      # lane-padded f32 input row
    out_row = lane_width * out_itemsize
    tmp_row = lane_width * 4                # f32 intermediates
    per_row = 2 * in_row + 2 * out_row + 2 * tmp_row
    t = max(8, (budget // per_row) // 8 * 8)
    if rows <= t:
        return int(rows)                    # one block == full array (always legal)
    return int(t)


def binary_encoder(x, weight, bias, *, out_dtype=None):
    """Forward pass of BinaryEncoder: sigmoid(x @ W.T + b).

    x      : (..., 1)
    weight : (H, 1)  -- PyTorch nn.Linear layout (out_features, in_features)
    bias   : (H,)
    out_dtype: defaults to x.dtype.  This kernel is output-writeback bound, so
      pass jnp.bfloat16 (compute stays f32 in-kernel) to halve HBM write bytes
      if downstream tolerates it.  Call under jax.jit so the (rare) trailing
      slice fuses into the consumer instead of re-writing the output.
    """
    assert x.shape[-1] == 1, "BinaryEncoder expects in_features == 1"
    H = int(weight.shape[0])
    lead = x.shape[:-1]
    out_dtype = jnp.dtype(out_dtype) if out_dtype is not None else jnp.dtype(x.dtype)
    N = int(np.prod(lead)) if lead else 1

    # Lane-folding factor: fold F consecutive inputs into one output row of
    # width W = F*H (a multiple of 128) so every vector store / HBM writeback
    # is a dense, full-128-lane store (no masked vst.msk).
    F = 1 if H % 128 == 0 else 128 // math.gcd(H, 128)
    W = F * H
    K = F                                    # no wrapper-side sublane padding of x

    w_row = weight.reshape(1, H).astype(jnp.float32)
    b_row = bias.reshape(1, H).astype(jnp.float32)
    if F > 1:
        m = jnp.kron(jnp.eye(F, dtype=jnp.float32), w_row)   # (F, W): M[f, f*H+h] = w[h]
        b_t = jnp.tile(b_row, (1, F))                        # (1, W)
    else:
        m = w_row                                            # (1, H)
        b_t = b_row

    rows = pl.cdiv(N, F)
    n_pad = rows * F                         # pad only within the last F-group
    x_flat = x.reshape(N)
    if n_pad != N:                           # at most F-1 elements; none when F | N
        x_flat = jnp.pad(x_flat, (0, n_pad - N))
    x2 = x_flat.reshape(rows, F)

    tile_r = _choose_tile_rows(rows, K, W, out_dtype.itemsize)
    grid = (pl.cdiv(rows, tile_r),)          # ragged last block is masked by Pallas

    out = pl.pallas_call(
        _binary_encoder_kernel,
        out_shape=jax.ShapeDtypeStruct((rows, W), out_dtype),
        grid=grid,
        in_specs=[
            pl.BlockSpec((tile_r, K), lambda i: (i, 0)),
            pl.BlockSpec(m.shape, lambda i: (0, 0)),      # grid-resident weights
            pl.BlockSpec(b_t.shape, lambda i: (0, 0)),    # grid-resident bias
        ],
        out_specs=pl.BlockSpec((tile_r, W), lambda i: (i, 0)),
        compiler_params=pltpu.CompilerParams(
            # TODO(synk): on v7x confirm via xprof that the 1-D "parallel" grid is
            # sharded across both TensorCores; if not, switch to CORE_PARALLEL or
            # an explicit 2-wide leading grid axis.
            dimension_semantics=("parallel",),
            vmem_limit_bytes=48 * 1024 * 1024,
        ),
        cost_estimate=pl.CostEstimate(
            flops=2 * rows * K * W,
            transcendentals=rows * W,
            bytes_accessed=(rows * K * x.dtype.itemsize
                            + rows * W * out_dtype.itemsize
                            + (int(m.size) + int(b_t.size)) * 4),
        ),
    )(x2, m, b_t)

    # (rows, F*H) row-major is exactly (rows*F, H).  The reshape is a free
    # contiguous view; the [:N] slice only exists when F does not divide N.
    out = out.reshape(n_pad, H)
    if n_pad != N:
        out = out[:N]
    return out.reshape(*lead, H)


if __name__ == "__main__":
    key = jax.random.PRNGKey(0)
    k_x, k_w, k_b = jax.random.split(key, 3)

    output_size = 32            # params['output_size']
    batch, seq = 2, 8           # small leading dims; last dim must be 1

    # PyTorch nn.Linear(1, H) default init: U(-1/sqrt(1), 1/sqrt(1)) = U(-1, 1)
    weight = jax.random.uniform(k_w, (output_size, 1), jnp.float32, -1.0, 1.0)
    bias = jax.random.uniform(k_b, (output_size,), jnp.float32, -1.0, 1.0)

    x = jax.random.normal(k_x, (batch, seq, 1), jnp.float32)

    out = jax.jit(binary_encoder)(x, weight, bias)
    out = jax.block_until_ready(out)

    # Reference check in plain JAX: sigmoid(x @ W.T + b).
    ref = jax.nn.sigmoid(jnp.einsum("bsi,hi->bsh", x, weight) + bias)
    assert out.shape == (batch, seq, output_size)
    # Exact-precision matmul + tanh-based sigmoid: observed error ~1e-6; the
    # tolerance below is deliberately conservative.
    np.testing.assert_allclose(np.asarray(out), np.asarray(ref), rtol=1e-3, atol=1e-3)

    print("KERNEL_OK")
</pallas_src>

<mosaic_0001>
module attributes {stable_mosaic.version = 11 : i64} {
  func.func @_binary_encoder_kernel(%arg0: i32, %arg1: memref<4x4xf32, #tpu.memory_space<vmem>>, %arg2: memref<4x128xf32, #tpu.memory_space<vmem>>, %arg3: memref<1x128xf32, #tpu.memory_space<vmem>>, %arg4: memref<4x128xf32, #tpu.memory_space<vmem>>) attributes {dimension_semantics = [#tpu.dimension_semantics<parallel>], iteration_bounds = array<i64: 1>, scalar_prefetch = 0 : i64, scratch_operands = 0 : i64, tpu.core_type = #tpu.core_type<tc>, window_params = [{transform_indices = @transform_0, window_bounds = array<i64: 4, 4>}, {pipeline_mode = #tpu.pipeline_mode<synchronous>, transform_indices = @transform_1, window_bounds = array<i64: 4, 128>}, {pipeline_mode = #tpu.pipeline_mode<synchronous>, transform_indices = @transform_2, window_bounds = array<i64: 1, 128>}, {transform_indices = @transform_3, window_bounds = array<i64: 4, 128>}]} {
    %c0 = arith.constant 0 : index
    %c0_0 = arith.constant 0 : index
    %0 = vector.load %arg1[%c0, %c0_0] : memref<4x4xf32, #tpu.memory_space<vmem>>, vector<4x4xf32>
    %c0_1 = arith.constant 0 : index
    %c0_2 = arith.constant 0 : index
    %1 = vector.load %arg2[%c0_1, %c0_2] : memref<4x128xf32, #tpu.memory_space<vmem>>, vector<4x128xf32>
    %cst = arith.constant dense<0.000000e+00> : vector<4x128xf32>
    %2 = tpu.matmul %0, %1, %cst {dimension_numbers = #tpu.dot_dimension_numbers<[1], [0], [0], [1], [0, 0, 1, 1], [], []>, precision = #tpu.contract_precision<fp32>} : vector<4x4xf32>, vector<4x128xf32>, vector<4x128xf32> -> vector<4x128xf32>
    %c0_3 = arith.constant 0 : index
    %c0_4 = arith.constant 0 : index
    %3 = vector.load %arg3[%c0_3, %c0_4] : memref<1x128xf32, #tpu.memory_space<vmem>>, vector<1x128xf32>
    %4 = vector.broadcast %3 : vector<1x128xf32> to vector<4x128xf32>
    %5 = arith.addf %2, %4 : vector<4x128xf32>
    %cst_5 = arith.constant 5.000000e-01 : f32
    %6 = vector.broadcast %cst_5 : f32 to vector<4x128xf32>
    %7 = arith.mulf %6, %5 : vector<4x128xf32>
    %8 = math.tanh %7 : vector<4x128xf32>
    %cst_6 = arith.constant 5.000000e-01 : f32
    %9 = vector.broadcast %cst_6 : f32 to vector<4x128xf32>
    %10 = arith.mulf %9, %8 : vector<4x128xf32>
    %cst_7 = arith.constant 5.000000e-01 : f32
    %11 = vector.broadcast %cst_7 : f32 to vector<4x128xf32>
    %12 = arith.addf %10, %11 : vector<4x128xf32>
    %c0_8 = arith.constant 0 : index
    %c0_9 = arith.constant 0 : index
    %13 = vector.load %arg4[%c0_8, %c0_9] : memref<4x128xf32, #tpu.memory_space<vmem>>, vector<4x128xf32>
    tpu.vector_store %arg4[%c0_8, %c0_9], %12 {strides = array<i32>} : memref<4x128xf32, #tpu.memory_space<vmem>>, vector<4x128xf32>,
    return
  }
  func.func @transform_0(%arg0: i32) -> (i32, i32) {
    %c0_i32 = arith.constant 0 : i32
    %c0_i32_0 = arith.constant 0 : i32
    return %arg0, %c0_i32 : i32, i32
  }
  func.func @transform_1(%arg0: i32) -> (i32, i32) {
    %c0_i32 = arith.constant 0 : i32
    %c0_i32_0 = arith.constant 0 : i32
    %c0_i32_1 = arith.constant 0 : i32
    return %c0_i32, %c0_i32_0 : i32, i32
  }
  func.func @transform_2(%arg0: i32) -> (i32, i32) {
    %c0_i32 = arith.constant 0 : i32
    %c0_i32_0 = arith.constant 0 : i32
    %c0_i32_1 = arith.constant 0 : i32
    return %c0_i32, %c0_i32_0 : i32, i32
  }
  func.func @transform_3(%arg0: i32) -> (i32, i32) {
    %c0_i32 = arith.constant 0 : i32
    %c0_i32_0 = arith.constant 0 : i32
    return %arg0, %c0_i32 : i32, i32
  }
}

</mosaic_0001>

<llo_original>
// kernel: binary_encoder.1
$region0: #{binary_encoder.1}
  #allocation0 [shape = 'u32[]', space=smem, size = 0x4, offset = 0x4, fixed_abs, tag = 'smem constant byte address 0x4 - core index']
  #allocation1 [shape = 'u32[144,128]{1,0:T(1,128)}', space=vmem, size = 0x12000, scoped, tag = 'internal scratch']
  %s0 = inlined_call_operand.vmem [shape: f32[4,4], index: 0, kind: input, shape index: {}]
  %s1 = inlined_call_operand.vmem [shape: f32[4,128], index: 1, kind: input, shape index: {}]
  %s2 = inlined_call_operand.vmem [shape: f32[1,128], index: 2, kind: input, shape index: {}]
  %s3 = inlined_call_operand.vmem [shape: f32[4,128], index: 3, kind: output, shape index: {}]
  %s4 = sld [smem:[#allocation0]]
  $region22: #{binary_encoder.1} parent=0
    _
  %s6 = ssub.s32 1, %s4
  %s7 = scalar_select 0, %s6, %s4
  // Predicated region
  $region2: #{binary_encoder.1} parent=0 // pred_check
    _
  $region3: #{binary_encoder.1} parent=0 // pred_check_branch
    %9 = sbr.rel (0) target = $region5
  $region4: #{binary_encoder.1} parent=0 // pred_region
    _
  $region5: #{binary_encoder.1} parent=0 // pred_fallthru
    _
  // Predicated region
  $region6: #{binary_encoder.1} parent=0 // pred_check
    _
  $region7: #{binary_encoder.1} parent=0 // pred_check_branch
    %11 = sbr.rel (0) target = $region9
  $region8: #{binary_encoder.1} parent=0 // pred_region
    _
  $region9: #{binary_encoder.1} parent=0 // pred_fallthru
    _
  // Predicated region
  $region10: #{binary_encoder.1} parent=0 // pred_check
    _
  $region11: #{binary_encoder.1} parent=0 // pred_check_branch
    %13 = sbr.rel (0) target = $region13
  $region12: #{binary_encoder.1} parent=0 // pred_region
    _
  $region13: #{binary_encoder.1} parent=0 // pred_fallthru
    _
  %v14 = vld [vmem:[%s0] sm:$0xf]
  %v15 = vld [vmem:[%s1] sm:$0xf]
  %v16 = vld [vmem:[%s2] sm:$0x1]
  %v18 = vlaneseq
  %v19 = vshrl.u32 %v18, 7
  %v20 = vsub.s32 0, %v19
  %v21 = vrot.slane %v16, %v20
  %vm23 = vcmask 31744
  %v25 = vsel %vm23, %v14, 0
  %vm27 = vcmask 1043456
  %v29 = vsel %vm27, %v15, 0
  %31 = vmatprep.subr.mxu0 0.0
  %v32 = vand.u32 %v29, 4294901760
  %33 = vmatpush1.msra.mxu0 %v32
  %34 = vmatprep.subr.mxu0 0.0
  %35 = vmatpush1.msra.mxu0 0.0
  %36 = vmatprep.subr.mxu0 0.0
  %37 = vmatpush1.msra.mxu0 0.0
  %38 = vmatprep.subr.mxu0 0.0
  %39 = vmatpush1.msra.mxu0 0.0
  %40 = vmatprep.subr.mxu0 0.0
  %41 = vmatpush1.msra.mxu0 0.0
  %42 = vmatprep.subr.mxu0 0.0
  %43 = vmatpush1.msra.mxu0 0.0
  %44 = vmatprep.subr.mxu0 0.0
  %45 = vmatpush1.msra.mxu0 0.0
  %46 = vmatprep.subr.mxu0 0.0
  %47 = vmatpush1.msra.mxu0 0.0
  %48 = vmatprep.subr.mxu0 0.0
  %49 = vmatpush1.msra.mxu0 0.0
  %50 = vmatprep.subr.mxu0 0.0
  %51 = vmatpush1.msra.mxu0 0.0
  %52 = vmatprep.subr.mxu0 0.0
  %53 = vmatpush1.msra.mxu0 0.0
  %54 = vmatprep.subr.mxu0 0.0
  %55 = vmatpush1.msra.mxu0 0.0
  %56 = vmatprep.subr.mxu0 0.0
  %57 = vmatpush1.msra.mxu0 0.0
  %58 = vmatprep.subr.mxu0 0.0
  %59 = vmatpush1.msra.mxu0 0.0
  %60 = vmatprep.subr.mxu0 0.0
  %61 = vmatpush1.msra.mxu0 0.0
  %62 = vmatprep.subr.mxu0 0.0
  %63 = vmatpush1.msra.mxu0 0.0
  %64 = vmatprep.subr.mxu0 0.0
  %65 = vmatpush1.msra.mxu0 0.0
  %66 = vmatprep.subr.mxu0 0.0
  %67 = vmatpush1.msra.mxu0 0.0
  %68 = vmatprep.subr.mxu0 0.0
  %69 = vmatpush1.msra.mxu0 0.0
  %70 = vmatprep.subr.mxu0 0.0
  %71 = vmatpush1.msra.mxu0 0.0
  %72 = vmatprep.subr.mxu0 0.0
  %73 = vmatpush1.msra.mxu0 0.0
  %74 = vmatprep.subr.mxu0 0.0
  %75 = vmatpush1.msra.mxu0 0.0
  %76 = vmatprep.subr.mxu0 0.0
  %77 = vmatpush1.msra.mxu0 0.0
  %78 = vmatprep.subr.mxu0 0.0
  %79 = vmatpush1.msra.mxu0 0.0
  %80 = vmatprep.subr.mxu0 0.0
  %81 = vmatpush1.msra.mxu0 0.0
  %82 = vmatprep.subr.mxu0 0.0
  %83 = vmatpush1.msra.mxu0 0.0
  %84 = vmatprep.subr.mxu0 0.0
  %85 = vmatpush1.msra.mxu0 0.0
  %86 = vmatprep.subr.mxu0 0.0
  %87 = vmatpush1.msra.mxu0 0.0
  %88 = vmatprep.subr.mxu0 0.0
  %89 = vmatpush1.msra.mxu0 0.0
  %90 = vmatprep.subr.mxu0 0.0
  %91 = vmatpush1.msra.mxu0 0.0
  %92 = vmatprep.subr.mxu0 0.0
  %93 = vmatpush1.msra.mxu0 0.0
  %94 = vmatprep.subr.mxu0 0.0
  %95 = vmatpush1.msra.mxu0 0.0
  %96 = vmatprep.mubr.f32.mxu0 0.0
  %v97 = vand.u32 %v25, 4294901760
  %v98 = vsub.f32 %v25, %v97
  %v99 = vand.u32 %v98, 4294901760
  %v100 = vsub.f32 %v98, %v99
  %v101 = vand.u32 %v100, 4294901760
  %102 = vmatmul.mubr.f32.gmra.mrb[0].mxu0 %v101
  %v103 = vpop.f32.mrb[0].mxu0
  %v104 = vadd.f32 %v21, %v103
  %v105 = vpop.f32.mrb[0].mxu0
  %106 = vdwg.mxu0
  %107 = vmatprep.subr.mxu0 0.0
  %v108 = vand.u32 %v29, 4294901760
  %v109 = vsub.f32 %v29, %v108
  %v110 = vand.u32 %v109, 4294901760
  %v111 = vsub.f32 %v109, %v110
  %v112 = vand.u32 %v111, 4294901760
  %113 = vmatpush1.msra.mxu0 %v112
  %114 = vmatprep.subr.mxu0 0.0
  %115 = vmatpush1.msra.mxu0 0.0
  %116 = vmatprep.subr.mxu0 0.0
  %117 = vmatpush1.msra.mxu0 0.0
  %118 = vmatprep.subr.mxu0 0.0
  %119 = vmatpush1.msra.mxu0 0.0
  %120 = vmatprep.subr.mxu0 0.0
  %121 = vmatpush1.msra.mxu0 0.0
  %122 = vmatprep.subr.mxu0 0.0
  %123 = vmatpush1.msra.mxu0 0.0
  %124 = vmatprep.subr.mxu0 0.0
  %125 = vmatpush1.msra.mxu0 0.0
  %126 = vmatprep.subr.mxu0 0.0
  %127 = vmatpush1.msra.mxu0 0.0
  %128 = vmatprep.subr.mxu0 0.0
  %129 = vmatpush1.msra.mxu0 0.0
  %130 = vmatprep.subr.mxu0 0.0
  %131 = vmatpush1.msra.mxu0 0.0
  %132 = vmatprep.subr.mxu0 0.0
  %133 = vmatpush1.msra.mxu0 0.0
  %134 = vmatprep.subr.mxu0 0.0
  %135 = vmatpush1.msra.mxu0 0.0
  %136 = vmatprep.subr.mxu0 0.0
  %137 = vmatpush1.msra.mxu0 0.0
  %138 = vmatprep.subr.mxu0 0.0
  %139 = vmatpush1.msra.mxu0 0.0
  %140 = vmatprep.subr.mxu0 0.0
  %141 = vmatpush1.msra.mxu0 0.0
  %142 = vmatprep.subr.mxu0 0.0
  %143 = vmatpush1.msra.mxu0 0.0
  %144 = vmatprep.subr.mxu0 0.0
  %145 = vmatpush1.msra.mxu0 0.0
  %146 = vmatprep.subr.mxu0 0.0
  %147 = vmatpush1.msra.mxu0 0.0
  %148 = vmatprep.subr.mxu0 0.0
  %149 = vmatpush1.msra.mxu0 0.0
  %150 = vmatprep.subr.mxu0 0.0
  %151 = vmatpush1.msra.mxu0 0.0
  %152 = vmatprep.subr.mxu0 0.0
  %153 = vmatpush1.msra.mxu0 0.0
  %154 = vmatprep.subr.mxu0 0.0
  %155 = vmatpush1.msra.mxu0 0.0
  %156 = vmatprep.subr.mxu0 0.0
  %157 = vmatpush1.msra.mxu0 0.0
  %158 = vmatprep.subr.mxu0 0.0
  %159 = vmatpush1.msra.mxu0 0.0
  %160 = vmatprep.subr.mxu0 0.0
  %161 = vmatpush1.msra.mxu0 0.0
  %162 = vmatprep.subr.mxu0 0.0
  %163 = vmatpush1.msra.mxu0 0.0
  %164 = vmatprep.subr.mxu0 0.0
  %165 = vmatpush1.msra.mxu0 0.0
  %166 = vmatprep.subr.mxu0 0.0
  %167 = vmatpush1.msra.mxu0 0.0
  %168 = vmatprep.subr.mxu0 0.0
  %169 = vmatpush1.msra.mxu0 0.0
  %170 = vmatprep.subr.mxu0 0.0
  %171 = vmatpush1.msra.mxu0 0.0
  %172 = vmatprep.subr.mxu0 0.0
  %173 = vmatpush1.msra.mxu0 0.0
  %174 = vmatprep.subr.mxu0 0.0
  %175 = vmatpush1.msra.mxu0 0.0
  %176 = vmatprep.mubr.f32.mxu0 0.0
  %v177 = vand.u32 %v25, 4294901760
  %178 = vmatmul.mubr.f32.gmra.mrb[0].mxu0 %v177
  %v179 = vpop.f32.mrb[0].mxu0
  %v180 = vadd.f32 %v104, %v179
  %v181 = vpop.f32.mrb[0].mxu0
  %182 = vdwg.mxu0
  %183 = vmatprep.subr.mxu0 0.0
  %v184 = vand.u32 %v29, 4294901760
  %v185 = vsub.f32 %v29, %v184
  %186 = vmatpush1.msra.mxu0 %v185
  %187 = vmatprep.subr.mxu0 0.0
  %188 = vmatpush1.msra.mxu0 0.0
  %189 = vmatprep.subr.mxu0 0.0
  %190 = vmatpush1.msra.mxu0 0.0
  %191 = vmatprep.subr.mxu0 0.0
  %192 = vmatpush1.msra.mxu0 0.0
  %193 = vmatprep.subr.mxu0 0.0
  %194 = vmatpush1.msra.mxu0 0.0
  %195 = vmatprep.subr.mxu0 0.0
  %196 = vmatpush1.msra.mxu0 0.0
  %197 = vmatprep.subr.mxu0 0.0
  %198 = vmatpush1.msra.mxu0 0.0
  %199 = vmatprep.subr.mxu0 0.0
  %200 = vmatpush1.msra.mxu0 0.0
  %201 = vmatprep.subr.mxu0 0.0
  %202 = vmatpush1.msra.mxu0 0.0
  %203 = vmatprep.subr.mxu0 0.0
  %204 = vmatpush1.msra.mxu0 0.0
  %205 = vmatprep.subr.mxu0 0.0
  %206 = vmatpush1.msra.mxu0 0.0
  %207 = vmatprep.subr.mxu0 0.0
  %208 = vmatpush1.msra.mxu0 0.0
  %209 = vmatprep.subr.mxu0 0.0
  %210 = vmatpush1.msra.mxu0 0.0
  %211 = vmatprep.subr.mxu0 0.0
  %212 = vmatpush1.msra.mxu0 0.0
  %213 = vmatprep.subr.mxu0 0.0
  %214 = vmatpush1.msra.mxu0 0.0
  %215 = vmatprep.subr.mxu0 0.0
  %216 = vmatpush1.msra.mxu0 0.0
  %217 = vmatprep.subr.mxu0 0.0
  %218 = vmatpush1.msra.mxu0 0.0
  %219 = vmatprep.subr.mxu0 0.0
  %220 = vmatpush1.msra.mxu0 0.0
  %221 = vmatprep.subr.mxu0 0.0
  %222 = vmatpush1.msra.mxu0 0.0
  %223 = vmatprep.subr.mxu0 0.0
  %224 = vmatpush1.msra.mxu0 0.0
  %225 = vmatprep.subr.mxu0 0.0
  %226 = vmatpush1.msra.mxu0 0.0
  %227 = vmatprep.subr.mxu0 0.0
  %228 = vmatpush1.msra.mxu0 0.0
  %229 = vmatprep.subr.mxu0 0.0
  %230 = vmatpush1.msra.mxu0 0.0
  %231 = vmatprep.subr.mxu0 0.0
  %232 = vmatpush1.msra.mxu0 0.0
  %233 = vmatprep.subr.mxu0 0.0
  %234 = vmatpush1.msra.mxu0 0.0
  %235 = vmatprep.subr.mxu0 0.0
  %236 = vmatpush1.msra.mxu0 0.0
  %237 = vmatprep.subr.mxu0 0.0
  %238 = vmatpush1.msra.mxu0 0.0
  %239 = vmatprep.subr.mxu0 0.0
  %240 = vmatpush1.msra.mxu0 0.0
  %241 = vmatprep.subr.mxu0 0.0
  %242 = vmatpush1.msra.mxu0 0.0
  %243 = vmatprep.subr.mxu0 0.0
  %244 = vmatpush1.msra.mxu0 0.0
  %245 = vmatprep.subr.mxu0 0.0
  %246 = vmatpush1.msra.mxu0 0.0
  %247 = vmatprep.subr.mxu0 0.0
  %248 = vmatpush1.msra.mxu0 0.0
  %249 = vmatprep.mubr.f32.mxu0 0.0
  %v250 = vand.u32 %v25, 4294901760
  %v251 = vsub.f32 %v25, %v250
  %252 = vmatmul.mubr.f32.gmra.mrb[0].mxu0 %v251
  %v253 = vpop.f32.mrb[0].mxu0
  %v254 = vadd.f32 %v180, %v253
  %v255 = vpop.f32.mrb[0].mxu0
  %256 = vdwg.mxu0
  %257 = vmatprep.subr.mxu0 0.0
  %v258 = vand.u32 %v29, 4294901760
  %259 = vmatpush1.msra.mxu0 %v258
  %260 = vmatprep.subr.mxu0 0.0
  %261 = vmatpush1.msra.mxu0 0.0
  %262 = vmatprep.subr.mxu0 0.0
  %263 = vmatpush1.msra.mxu0 0.0
  %264 = vmatprep.subr.mxu0 0.0
  %265 = vmatpush1.msra.mxu0 0.0
  %266 = vmatprep.subr.mxu0 0.0
  %267 = vmatpush1.msra.mxu0 0.0
  %268 = vmatprep.subr.mxu0 0.0
  %269 = vmatpush1.msra.mxu0 0.0
  %270 = vmatprep.subr.mxu0 0.0
  %271 = vmatpush1.msra.mxu0 0.0
  %272 = vmatprep.subr.mxu0 0.0
  %273 = vmatpush1.msra.mxu0 0.0
  %274 = vmatprep.subr.mxu0 0.0
  %275 = vmatpush1.msra.mxu0 0.0
  %276 = vmatprep.subr.mxu0 0.0
  %277 = vmatpush1.msra.mxu0 0.0
  %278 = vmatprep.subr.mxu0 0.0
  %279 = vmatpush1.msra.mxu0 0.0
  %280 = vmatprep.subr.mxu0 0.0
  %281 = vmatpush1.msra.mxu0 0.0
  %282 = vmatprep.subr.mxu0 0.0
  %283 = vmatpush1.msra.mxu0 0.0
  %284 = vmatprep.subr.mxu0 0.0
  %285 = vmatpush1.msra.mxu0 0.0
  %286 = vmatprep.subr.mxu0 0.0
  %287 = vmatpush1.msra.mxu0 0.0
  %288 = vmatprep.subr.mxu0 0.0
  %289 = vmatpush1.msra.mxu0 0.0
  %290 = vmatprep.subr.mxu0 0.0
  %291 = vmatpush1.msra.mxu0 0.0
  %292 = vmatprep.subr.mxu0 0.0
  %293 = vmatpush1.msra.mxu0 0.0
  %294 = vmatprep.subr.mxu0 0.0
  %295 = vmatpush1.msra.mxu0 0.0
  %296 = vmatprep.subr.mxu0 0.0
  %297 = vmatpush1.msra.mxu0 0.0
  %298 = vmatprep.subr.mxu0 0.0
  %299 = vmatpush1.msra.mxu0 0.0
  %300 = vmatprep.subr.mxu0 0.0
  %301 = vmatpush1.msra.mxu0 0.0
  %302 = vmatprep.subr.mxu0 0.0
  %303 = vmatpush1.msra.mxu0 0.0
  %304 = vmatprep.subr.mxu0 0.0
  %305 = vmatpush1.msra.mxu0 0.0
  %306 = vmatprep.subr.mxu0 0.0
  %307 = vmatpush1.msra.mxu0 0.0
  %308 = vmatprep.subr.mxu0 0.0
  %309 = vmatpush1.msra.mxu0 0.0
  %310 = vmatprep.subr.mxu0 0.0
  %311 = vmatpush1.msra.mxu0 0.0
  %312 = vmatprep.subr.mxu0 0.0
  %313 = vmatpush1.msra.mxu0 0.0
  %314 = vmatprep.subr.mxu0 0.0
  %315 = vmatpush1.msra.mxu0 0.0
  %316 = vmatprep.subr.mxu0 0.0
  %317 = vmatpush1.msra.mxu0 0.0
  %318 = vmatprep.subr.mxu0 0.0
  %319 = vmatpush1.msra.mxu0 0.0
  %320 = vmatprep.subr.mxu0 0.0
  %321 = vmatpush1.msra.mxu0 0.0
  %322 = vmatprep.mubr.f32.mxu0 0.0
  %v323 = vand.u32 %v25, 4294901760
  %v324 = vsub.f32 %v25, %v323
  %v325 = vand.u32 %v324, 4294901760
  %326 = vmatmul.mubr.f32.gmra.mrb[0].mxu0 %v325
  %v327 = vpop.f32.mrb[0].mxu0
  %v328 = vadd.f32 %v254, %v327
  %v329 = vpop.f32.mrb[0].mxu0
  %330 = vdwg.mxu0
  %331 = vmatprep.subr.mxu0 0.0
  %v332 = vand.u32 %v29, 4294901760
  %v333 = vsub.f32 %v29, %v332
  %v334 = vand.u32 %v333, 4294901760
  %335 = vmatpush1.msra.mxu0 %v334
  %336 = vmatprep.subr.mxu0 0.0
  %337 = vmatpush1.msra.mxu0 0.0
  %338 = vmatprep.subr.mxu0 0.0
  %339 = vmatpush1.msra.mxu0 0.0
  %340 = vmatprep.subr.mxu0 0.0
  %341 = vmatpush1.msra.mxu0 0.0
  %342 = vmatprep.subr.mxu0 0.0
  %343 = vmatpush1.msra.mxu0 0.0
  %344 = vmatprep.subr.mxu0 0.0
  %345 = vmatpush1.msra.mxu0 0.0
  %346 = vmatprep.subr.mxu0 0.0
  %347 = vmatpush1.msra.mxu0 0.0
  %348 = vmatprep.subr.mxu0 0.0
  %349 = vmatpush1.msra.mxu0 0.0
  %350 = vmatprep.subr.mxu0 0.0
  %351 = vmatpush1.msra.mxu0 0.0
  %352 = vmatprep.subr.mxu0 0.0
  %353 = vmatpush1.msra.mxu0 0.0
  %354 = vmatprep.subr.mxu0 0.0
  %355 = vmatpush1.msra.mxu0 0.0
  %356 = vmatprep.subr.mxu0 0.0
  %357 = vmatpush1.msra.mxu0 0.0
  %358 = vmatprep.subr.mxu0 0.0
  %359 = vmatpush1.msra.mxu0 0.0
  %360 = vmatprep.subr.mxu0 0.0
  %361 = vmatpush1.msra.mxu0 0.0
  %362 = vmatprep.subr.mxu0 0.0
  %363 = vmatpush1.msra.mxu0 0.0
  %364 = vmatprep.subr.mxu0 0.0
  %365 = vmatpush1.msra.mxu0 0.0
  %366 = vmatprep.subr.mxu0 0.0
  %367 = vmatpush1.msra.mxu0 0.0
  %368 = vmatprep.subr.mxu0 0.0
  %369 = vmatpush1.msra.mxu0 0.0
  %370 = vmatprep.subr.mxu0 0.0
  %371 = vmatpush1.msra.mxu0 0.0
  %372 = vmatprep.subr.mxu0 0.0
  %373 = vmatpush1.msra.mxu0 0.0
  %374 = vmatprep.subr.mxu0 0.0
  %375 = vmatpush1.msra.mxu0 0.0
  %376 = vmatprep.subr.mxu0 0.0
  %377 = vmatpush1.msra.mxu0 0.0
  %378 = vmatprep.subr.mxu0 0.0
  %379 = vmatpush1.msra.mxu0 0.0
  %380 = vmatprep.subr.mxu0 0.0
  %381 = vmatpush1.msra.mxu0 0.0
  %382 = vmatprep.subr.mxu0 0.0
  %383 = vmatpush1.msra.mxu0 0.0
  %384 = vmatprep.subr.mxu0 0.0
  %385 = vmatpush1.msra.mxu0 0.0
  %386 = vmatprep.subr.mxu0 0.0
  %387 = vmatpush1.msra.mxu0 0.0
  %388 = vmatprep.subr.mxu0 0.0
  %389 = vmatpush1.msra.mxu0 0.0
  %390 = vmatprep.subr.mxu0 0.0
  %391 = vmatpush1.msra.mxu0 0.0
  %392 = vmatprep.subr.mxu0 0.0
  %393 = vmatpush1.msra.mxu0 0.0
  %394 = vmatprep.subr.mxu0 0.0
  %395 = vmatpush1.msra.mxu0 0.0
  %396 = vmatprep.subr.mxu0 0.0
  %397 = vmatpush1.msra.mxu0 0.0
  %398 = vmatprep.mubr.f32.mxu0 0.0
  %v399 = vand.u32 %v25, 4294901760
  %400 = vmatmul.mubr.f32.gmra.mrb[0].mxu0 %v399
  %v401 = vpop.f32.mrb[0].mxu0
  %v402 = vadd.f32 %v328, %v401
  %v403 = vpop.f32.mrb[0].mxu0
  %404 = vdwg.mxu0
  %405 = vmatprep.subr.mxu0 0.0
  %v406 = vand.u32 %v29, 4294901760
  %407 = vmatpush1.msra.mxu0 %v406
  %408 = vmatprep.subr.mxu0 0.0
  %409 = vmatpush1.msra.mxu0 0.0
  %410 = vmatprep.subr.mxu0 0.0
  %411 = vmatpush1.msra.mxu0 0.0
  %412 = vmatprep.subr.mxu0 0.0
  %413 = vmatpush1.msra.mxu0 0.0
  %414 = vmatprep.subr.mxu0 0.0
  %415 = vmatpush1.msra.mxu0 0.0
  %416 = vmatprep.subr.mxu0 0.0
  %417 = vmatpush1.msra.mxu0 0.0
  %418 = vmatprep.subr.mxu0 0.0
  %419 = vmatpush1.msra.mxu0 0.0
  %420 = vmatprep.subr.mxu0 0.0
  %421 = vmatpush1.msra.mxu0 0.0
  %422 = vmatprep.subr.mxu0 0.0
  %423 = vmatpush1.msra.mxu0 0.0
  %424 = vmatprep.subr.mxu0 0.0
  %425 = vmatpush1.msra.mxu0 0.0
  %426 = vmatprep.subr.mxu0 0.0
  %427 = vmatpush1.msra.mxu0 0.0
  %428 = vmatprep.subr.mxu0 0.0
  %429 = vmatpush1.msra.mxu0 0.0
  %430 = vmatprep.subr.mxu0 0.0
  %431 = vmatpush1.msra.mxu0 0.0
  %432 = vmatprep.subr.mxu0 0.0
  %433 = vmatpush1.msra.mxu0 0.0
  %434 = vmatprep.subr.mxu0 0.0
  %435 = vmatpush1.msra.mxu0 0.0
  %436 = vmatprep.subr.mxu0 0.0
  %437 = vmatpush1.msra.mxu0 0.0
  %438 = vmatprep.subr.mxu0 0.0
  %439 = vmatpush1.msra.mxu0 0.0
  %440 = vmatprep.subr.mxu0 0.0
  %441 = vmatpush1.msra.mxu0 0.0
  %442 = vmatprep.subr.mxu0 0.0
  %443 = vmatpush1.msra.mxu0 0.0
  %444 = vmatprep.subr.mxu0 0.0
  %445 = vmatpush1.msra.mxu0 0.0
  %446 = vmatprep.subr.mxu0 0.0
  %447 = vmatpush1.msra.mxu0 0.0
  %448 = vmatprep.subr.mxu0 0.0
  %449 = vmatpush1.msra.mxu0 0.0
  %450 = vmatprep.subr.mxu0 0.0
  %451 = vmatpush1.msra.mxu0 0.0
  %452 = vmatprep.subr.mxu0 0.0
  %453 = vmatpush1.msra.mxu0 0.0
  %454 = vmatprep.subr.mxu0 0.0
  %455 = vmatpush1.msra.mxu0 0.0
  %456 = vmatprep.subr.mxu0 0.0
  %457 = vmatpush1.msra.mxu0 0.0
  %458 = vmatprep.subr.mxu0 0.0
  %459 = vmatpush1.msra.mxu0 0.0
  %460 = vmatprep.subr.mxu0 0.0
  %461 = vmatpush1.msra.mxu0 0.0
  %462 = vmatprep.subr.mxu0 0.0
  %463 = vmatpush1.msra.mxu0 0.0
  %464 = vmatprep.subr.mxu0 0.0
  %465 = vmatpush1.msra.mxu0 0.0
  %466 = vmatprep.subr.mxu0 0.0
  %467 = vmatpush1.msra.mxu0 0.0
  %468 = vmatprep.subr.mxu0 0.0
  %469 = vmatpush1.msra.mxu0 0.0
  %470 = vmatprep.mubr.f32.mxu0 0.0
  %v471 = vand.u32 %v25, 4294901760
  %472 = vmatmul.mubr.f32.gmra.mrb[0].mxu0 %v471
  %v473 = vpop.f32.mrb[0].mxu0
  %v474 = vadd.f32 %v402, %v473
  %v475 = vpop.f32.mrb[0].mxu0
  %476 = vdwg.mxu0
  %v477 = vmul.f32 %v474, 0.5
  %v478 = vtanh.pop %v477
  %v479 = vmul.f32 %v478, 0.5
  %v480 = vadd.f32 %v479, 0.5
  %481 = vst [vmem:[%s3] sm:$0xf] %v480
  // Predicated region
  $region14: #{binary_encoder.1} parent=0 // pred_check
    _
  $region15: #{binary_encoder.1} parent=0 // pred_check_branch
    %483 = sbr.rel (0) target = $region17
  $region16: #{binary_encoder.1} parent=0 // pred_region
    _
  $region17: #{binary_encoder.1} parent=0 // pred_fallthru
    _
  // Predicated region
  $region18: #{binary_encoder.1} parent=0 // pred_check
    _
  $region19: #{binary_encoder.1} parent=0 // pred_check_branch
    %485 = sbr.rel (0) target = $region21
  $region20: #{binary_encoder.1} parent=0 // pred_region
    _
  $region21: #{binary_encoder.1} parent=0 // pred_fallthru
    _

</llo_original>
